<compile_context>
chip_gen: v7x
topology: tpu7x:2x2x1
jax: 0.10.0
libtpu: 0.0.40
codegen_flags: <defaults>
</compile_context>

<pallas_src>
import functools

import jax
import jax.numpy as jnp
from jax.experimental import pallas as pl
from jax.experimental.pallas import tpu as pltpu


# ----------------------------------------------------------------------------
# Kernels
# ----------------------------------------------------------------------------

def _rmsnorm_kernel(x_ref, w_ref, o_ref, *, dim: int, eps: float):
    """Standard path: one logical row per sublane row, reduce over lanes."""
    x = x_ref[...].astype(jnp.float32)                       # (tile, dim) f32
    w = w_ref[...]                                           # (1, dim)    f32
    ms = jnp.sum(x * x, axis=-1, keepdims=True) * (1.0 / dim)
    inv = jax.lax.rsqrt(ms + eps)                            # EUP
    o_ref[...] = (x * inv * w).astype(o_ref.dtype)


def _rmsnorm_folded_kernel(x_ref, w_ref, m_ref, o_ref, *, dim: int, eps: float):
    """Lane-dense path for dim < 128: g = 128 // dim rows folded into lanes.

    The per-row sum(x*x) is a segmented lane reduction, computed as a matmul
    with a block-diagonal 0/1 mask (MXU slot is free in this HBM-bound kernel).
    """
    x = x_ref[...].astype(jnp.float32)                       # (tile, 128) f32
    w = w_ref[...]                                           # (1, 128)    f32 (weight tiled g times)
    m = m_ref[...]                                           # (128, 128)  f32 block-diag mask
    seg = jax.lax.dot(x * x, m,
                      precision=jax.lax.Precision.HIGHEST,
                      preferred_element_type=jnp.float32)    # per-lane segment sum
    inv = jax.lax.rsqrt(seg * (1.0 / dim) + eps)
    o_ref[...] = (x * inv * w).astype(o_ref.dtype)


# ----------------------------------------------------------------------------
# Tiling / VMEM sizing
# ----------------------------------------------------------------------------

def _sublane_multiple(dtype) -> int:
    # Dense sublane packing: f32 -> 8, bf16 -> 16, int8/fp8 -> 32.
    bits = jnp.dtype(dtype).itemsize * 8
    return max(8, 256 // bits)


def _vmem_capacity_bytes() -> int:
    cap = 64 * 1024 * 1024  # conservative fallback: v7x per-TensorCore
    try:
        info = pltpu.get_tpu_info()
        cap = int(getattr(info, "vmem_capacity_bytes", cap))
    except Exception:
        pass
    return min(cap, 128 * 1024 * 1024)


def _bytes_per_tile_row(width: int, dtype) -> int:
    itemsize = jnp.dtype(dtype).itemsize
    # 2x double-buffered input tile + 2x double-buffered output tile
    # + ~3 tile-sized f32 intermediates (upcast, x*x, scaled product).
    return width * (2 * itemsize + 2 * itemsize + 3 * 4)


def _pick_row_tile(rows: int, width: int, dtype, vmem_cap: int) -> int:
    itemsize = jnp.dtype(dtype).itemsize
    sub = _sublane_multiple(dtype)

    # (a) Byte target per input block (roofline plateau / grid-step overhead).
    target_block_bytes = 8 << 20
    tile_bw = target_block_bytes // max(width * itemsize, 1)

    # (b) VMEM footprint bound: assume only 64 MiB usable (v7x per-TC), spend
    #     at most half of it on this kernel's buffers -> safe on every chip.
    budget = min(vmem_cap, 64 << 20) // 2
    tile_vmem = budget // max(_bytes_per_tile_row(width, dtype), 1)

    tile = max(min(tile_bw, tile_vmem), sub)
    tile = max(sub, (tile // sub) * sub)           # multiple of sublane packing
    rows_up = ((rows + sub - 1) // sub) * sub      # never exceed (padded) rows
    return int(min(tile, rows_up))


def _vmem_limit_bytes(row_tile: int, width: int, dtype, const_bytes: int,
                      vmem_cap: int) -> int:
    footprint = row_tile * _bytes_per_tile_row(width, dtype) + const_bytes
    limit = int(footprint * 1.25) + (2 << 20)      # +25% and +2 MiB headroom
    limit = max(limit, 4 << 20)
    return int(min(limit, vmem_cap))


# ----------------------------------------------------------------------------
# Wrapper
# ----------------------------------------------------------------------------

def rms_norm(x: jax.Array, weight: jax.Array, eps: float = 1e-6,
             row_tile: int | None = None) -> jax.Array:
    """RMSNorm over the last axis of x, matching F.rms_norm(x, (dim,), weight, eps)."""
    orig_shape = x.shape
    dim = orig_shape[-1]
    assert weight.shape == (dim,)

    x2d = x.reshape(-1, dim)
    rows = x2d.shape[0]
    vmem_cap = _vmem_capacity_bytes()

    w_f32 = weight.astype(jnp.float32)

    # Lane-dense fold path (zero-copy row-major reshape) when cheap.
    g = (128 // dim) if (dim < 128 and 128 % dim == 0) else 1
    fold = g > 1 and rows % g == 0 and rows > 0

    if fold:
        width = 128
        x_in = x2d.reshape(rows // g, width)
        w_in = jnp.tile(w_f32, g).reshape(1, width)
        lane = jnp.arange(width) // dim
        mask = (lane[:, None] == lane[None, :]).astype(jnp.float32)   # (128, 128)
        kernel = functools.partial(_rmsnorm_folded_kernel, dim=dim, eps=eps)
        const_bytes = width * 4 + width * width * 4
        extra_specs = [pl.BlockSpec((width, width), lambda i: (0, 0))]
        extra_args = (mask,)
    else:
        width = dim
        x_in = x2d
        w_in = w_f32.reshape(1, dim)
        kernel = functools.partial(_rmsnorm_kernel, dim=dim, eps=eps)
        const_bytes = dim * 4
        extra_specs = []
        extra_args = ()

    n_rows = x_in.shape[0]
    if row_tile is None:
        row_tile = _pick_row_tile(n_rows, width, x.dtype, vmem_cap)

    grid = (pl.cdiv(n_rows, row_tile),)   # partial final block masked by Pallas

    out = pl.pallas_call(
        kernel,
        out_shape=jax.ShapeDtypeStruct((n_rows, width), x.dtype),
        grid_spec=pltpu.PrefetchScalarGridSpec(
            num_scalar_prefetch=0,
            grid=grid,
            in_specs=[
                pl.BlockSpec((row_tile, width), lambda i: (i, 0)),
                pl.BlockSpec((1, width), lambda i: (0, 0)),
            ] + extra_specs,
            out_specs=pl.BlockSpec((row_tile, width), lambda i: (i, 0)),
        ),
        compiler_params=pltpu.CompilerParams(
            dimension_semantics=("parallel",),
            vmem_limit_bytes=_vmem_limit_bytes(row_tile, width, x.dtype,
                                               const_bytes, vmem_cap),
        ),
    )(x_in, w_in, *extra_args)

    return out.reshape(orig_shape)


def rms_norm_ref(x, weight, eps=1e-6):
    xf = x.astype(jnp.float32)
    inv = jax.lax.rsqrt(jnp.mean(xf * xf, axis=-1, keepdims=True) + eps)
    return (xf * inv * weight.astype(jnp.float32)).astype(x.dtype)


if __name__ == "__main__":
    key = jax.random.PRNGKey(0)
    batch, seq, hidden = 2, 8, 32

    x = jax.random.normal(key, (batch, seq, hidden), dtype=jnp.float32)
    # Deterministic param init: nn.Parameter(torch.ones(dim))
    weight = jnp.ones((hidden,), dtype=jnp.float32)

    # Fold (lane-dense) path: dim=32 < 128, rows divisible by 128//dim.
    out = jax.block_until_ready(rms_norm(x, weight, eps=1e-6))
    ref = rms_norm_ref(x, weight, eps=1e-6)
    assert out.shape == x.shape and out.dtype == x.dtype
    assert jnp.allclose(out, ref, atol=1e-5, rtol=1e-5)

    # Fallback (masked-store) path: rows not a multiple of the fold factor.
    x2 = jax.random.normal(jax.random.PRNGKey(0), (3, 5, hidden), dtype=jnp.float32)
    out2 = jax.block_until_ready(rms_norm(x2, weight, eps=1e-6))
    assert jnp.allclose(out2, rms_norm_ref(x2, weight, eps=1e-6), atol=1e-5, rtol=1e-5)

    # Standard lane-dense path: dim a multiple of 128, non-trivial weight.
    hidden3 = 256
    x3 = jax.random.normal(jax.random.PRNGKey(1), (2, 4, hidden3), dtype=jnp.float32)
    w3 = jax.random.normal(jax.random.PRNGKey(2), (hidden3,), dtype=jnp.float32)
    out3 = jax.block_until_ready(rms_norm(x3, w3, eps=1e-6))
    assert jnp.allclose(out3, rms_norm_ref(x3, w3, eps=1e-6), atol=1e-5, rtol=1e-5)

    print("KERNEL_OK")
</pallas_src>

<mosaic_0001>
module attributes {stable_mosaic.version = 11 : i64} {
  func.func @_rmsnorm_folded_kernel(%arg0: i32, %arg1: memref<8x128xf32, #tpu.memory_space<vmem>>, %arg2: memref<1x128xf32, #tpu.memory_space<vmem>>, %arg3: memref<128x128xf32, #tpu.memory_space<vmem>>, %arg4: memref<8x128xf32, #tpu.memory_space<vmem>>) attributes {dimension_semantics = [#tpu.dimension_semantics<parallel>], iteration_bounds = array<i64: 1>, scalar_prefetch = 0 : i64, scratch_operands = 0 : i64, tpu.core_type = #tpu.core_type<tc>, window_params = [{transform_indices = @transform_0, window_bounds = array<i64: 8, 128>}, {pipeline_mode = #tpu.pipeline_mode<synchronous>, transform_indices = @transform_1, window_bounds = array<i64: 1, 128>}, {pipeline_mode = #tpu.pipeline_mode<synchronous>, transform_indices = @transform_2, window_bounds = array<i64: 128, 128>}, {transform_indices = @transform_3, window_bounds = array<i64: 8, 128>}]} {
    %c0 = arith.constant 0 : index
    %c0_0 = arith.constant 0 : index
    %0 = vector.load %arg1[%c0, %c0_0] : memref<8x128xf32, #tpu.memory_space<vmem>>, vector<8x128xf32>
    %c0_1 = arith.constant 0 : index
    %c0_2 = arith.constant 0 : index
    %1 = vector.load %arg2[%c0_1, %c0_2] : memref<1x128xf32, #tpu.memory_space<vmem>>, vector<1x128xf32>
    %c0_3 = arith.constant 0 : index
    %c0_4 = arith.constant 0 : index
    %2 = vector.load %arg3[%c0_3, %c0_4] : memref<128x128xf32, #tpu.memory_space<vmem>>, vector<128x128xf32>
    %3 = arith.mulf %0, %0 : vector<8x128xf32>
    %cst = arith.constant dense<0.000000e+00> : vector<8x128xf32>
    %4 = tpu.matmul %3, %2, %cst {dimension_numbers = #tpu.dot_dimension_numbers<[1], [0], [0], [1], [0, 0, 1, 1], [], []>, precision = #tpu.contract_precision<fp32>} : vector<8x128xf32>, vector<128x128xf32>, vector<8x128xf32> -> vector<8x128xf32>
    %cst_5 = arith.constant 3.125000e-02 : f32
    %5 = vector.broadcast %cst_5 : f32 to vector<8x128xf32>
    %6 = arith.mulf %4, %5 : vector<8x128xf32>
    %cst_6 = arith.constant 9.99999997E-7 : f32
    %7 = vector.broadcast %cst_6 : f32 to vector<8x128xf32>
    %8 = arith.addf %6, %7 : vector<8x128xf32>
    %9 = math.rsqrt %8 : vector<8x128xf32>
    %10 = arith.mulf %0, %9 : vector<8x128xf32>
    %11 = vector.broadcast %1 : vector<1x128xf32> to vector<8x128xf32>
    %12 = arith.mulf %10, %11 : vector<8x128xf32>
    %c0_7 = arith.constant 0 : index
    %c0_8 = arith.constant 0 : index
    %13 = vector.load %arg4[%c0_7, %c0_8] : memref<8x128xf32, #tpu.memory_space<vmem>>, vector<8x128xf32>
    tpu.vector_store %arg4[%c0_7, %c0_8], %12 {strides = array<i32>} : memref<8x128xf32, #tpu.memory_space<vmem>>, vector<8x128xf32>,
    return
  }
  func.func @transform_0(%arg0: i32) -> (i32, i32) {
    %c0_i32 = arith.constant 0 : i32
    %c0_i32_0 = arith.constant 0 : i32
    return %arg0, %c0_i32 : i32, i32
  }
  func.func @transform_1(%arg0: i32) -> (i32, i32) {
    %c0_i32 = arith.constant 0 : i32
    %c0_i32_0 = arith.constant 0 : i32
    %c0_i32_1 = arith.constant 0 : i32
    return %c0_i32, %c0_i32_0 : i32, i32
  }
  func.func @transform_2(%arg0: i32) -> (i32, i32) {
    %c0_i32 = arith.constant 0 : i32
    %c0_i32_0 = arith.constant 0 : i32
    %c0_i32_1 = arith.constant 0 : i32
    return %c0_i32, %c0_i32_0 : i32, i32
  }
  func.func @transform_3(%arg0: i32) -> (i32, i32) {
    %c0_i32 = arith.constant 0 : i32
    %c0_i32_0 = arith.constant 0 : i32
    return %arg0, %c0_i32 : i32, i32
  }
}

</mosaic_0001>

<llo_original>
// kernel: tpu_custom_call.1
$region0: #{tpu_custom_call.1}
  #allocation0 [shape = 'u32[]', space=smem, size = 0x4, offset = 0x4, fixed_abs, tag = 'smem constant byte address 0x4 - core index']
  #allocation1 [shape = 'u32[144,128]{1,0:T(1,128)}', space=vmem, size = 0x12000, scoped, tag = 'internal scratch']
  %s0 = inlined_call_operand.hbm [shape: f32[4,128], index: 0, kind: input, shape index: {}]
  %s1 = inlined_call_operand.vmem [shape: f32[1,128], index: 1, kind: input, shape index: {}]
  %s2 = inlined_call_operand.hbm [shape: f32[128,128], index: 2, kind: input, shape index: {}]
  %s3 = inlined_call_operand.hbm [shape: f32[4,128], index: 3, kind: output, shape index: {}]
  %s4 = sld [smem:[#allocation0]]
  $region30: #{tpu_custom_call.1} parent=0
    _
  %s6 = ssub.s32 1, %s4
  %s7 = scalar_select 0, %s6, %s4
  $region1: #{tpu_custom_call.1} parent=0
    #allocation2 [shape = 'u8[4096]{0}', space=vmem, size = 0x1000, scoped, tag = 'input window, operand 0, single buffered']
    #allocation3 [shape = 's32[1]{0}', space=sflag, size = 0x4, scoped, tag = 'scoped memory for tpu_custom_call.1']
    #allocation4 [shape = 's32[1]{0}', space=sflag, size = 0x4, scoped, tag = 'scoped memory for tpu_custom_call.1']
    #allocation5 [shape = 'u8[65536]{0}', space=vmem, size = 0x10000, scoped, tag = 'input window, operand 2, single buffered']
    #allocation6 [shape = 's32[1]{0}', space=sflag, size = 0x4, scoped, tag = 'scoped memory for tpu_custom_call.1']
    #allocation7 [shape = 'u8[4096]{0}', space=vmem, size = 0x1000, scoped, tag = 'output window, operand 0, single buffered']
    %8 = vsyncpa [#allocation3], 0
    %9 = vsyncpa [#allocation6], 0
    %10 = vsyncpa [#allocation4], 0
    // Predicated region
    $region2: #{tpu_custom_call.1} parent=1 // pred_check
      _
    $region3: #{tpu_custom_call.1} parent=1 // pred_check_branch
      %12 = sbr.rel (0) target = $region5
    $region4: #{tpu_custom_call.1} parent=1 // pred_region
      %s14 = ssub.s32 128, 64
      %15 = vsyncadd [#allocation3], %s14
      %s16 = sshll.u32 [#allocation2], 4
      %s17 = int_to_ptr.vmem [resolvable:$true] %s16
      %22 = dma.hbm_to_vmem [thread:$0]  %s0, 64, %s17, [#allocation3], 64, 64, 4
    $region5: #{tpu_custom_call.1} parent=1 // pred_fallthru
      _
    // Predicated region
    $region6: #{tpu_custom_call.1} parent=1 // pred_check
      _
    $region7: #{tpu_custom_call.1} parent=1 // pred_check_branch
      %24 = sbr.rel (0) target = $region9
    $region8: #{tpu_custom_call.1} parent=1 // pred_region
      _
    $region9: #{tpu_custom_call.1} parent=1 // pred_fallthru
      _
    // Predicated region
    $region10: #{tpu_custom_call.1} parent=1 // pred_check
      _
    $region11: #{tpu_custom_call.1} parent=1 // pred_check_branch
      %26 = sbr.rel (0) target = $region13
    $region12: #{tpu_custom_call.1} parent=1 // pred_region
      %s28 = ssub.s32 2048, 2048
      %29 = vsyncadd [#allocation6], %s28
      %s30 = sshll.u32 [#allocation5], 4
      %s31 = int_to_ptr.vmem [resolvable:$true] %s30
      %36 = dma.hbm_to_vmem [thread:$0]  %s2, 2048, %s31, [#allocation6], 128, 128, 8
    $region13: #{tpu_custom_call.1} parent=1 // pred_fallthru
      _
    // Predicated region
    $region14: #{tpu_custom_call.1} parent=1 // pred_check
      _
    $region15: #{tpu_custom_call.1} parent=1 // pred_check_branch
      %38 = sbr.rel (0) target = $region17
    $region16: #{tpu_custom_call.1} parent=1 // pred_region
      %39 = dma.done [#allocation3], 128
    $region17: #{tpu_custom_call.1} parent=1 // pred_fallthru
      _
    // Predicated region
    $region18: #{tpu_custom_call.1} parent=1 // pred_check
      _
    $region19: #{tpu_custom_call.1} parent=1 // pred_check_branch
      %41 = sbr.rel (0) target = $region21
    $region20: #{tpu_custom_call.1} parent=1 // pred_region
      %42 = dma.done [#allocation6], 2048
    $region21: #{tpu_custom_call.1} parent=1 // pred_fallthru
      _
    %v43 = vld [vmem:[#allocation2] sm:$0xff]
    %v44 = vld [vmem:[%s1] sm:$0x1]
    %v45 = vld [vmem:[#allocation5] sm:$0xff]
    %v46 = vld [vmem:[#allocation5 + $0x8] sm:$0xff]
    %v47 = vld [vmem:[#allocation5 + $0x10] sm:$0xff]
    %v48 = vld [vmem:[#allocation5 + $0x18] sm:$0xff]
    %v49 = vld [vmem:[#allocation5 + $0x20] sm:$0xff]
    %v50 = vld [vmem:[#allocation5 + $0x28] sm:$0xff]
    %v51 = vld [vmem:[#allocation5 + $0x30] sm:$0xff]
    %v52 = vld [vmem:[#allocation5 + $0x38] sm:$0xff]
    %v53 = vld [vmem:[#allocation5 + $0x40] sm:$0xff]
    %v54 = vld [vmem:[#allocation5 + $0x48] sm:$0xff]
    %v55 = vld [vmem:[#allocation5 + $0x50] sm:$0xff]
    %v56 = vld [vmem:[#allocation5 + $0x58] sm:$0xff]
    %v57 = vld [vmem:[#allocation5 + $0x60] sm:$0xff]
    %v58 = vld [vmem:[#allocation5 + $0x68] sm:$0xff]
    %v59 = vld [vmem:[#allocation5 + $0x70] sm:$0xff]
    %v60 = vld [vmem:[#allocation5 + $0x78] sm:$0xff]
    %v61 = vmul.f32 %v43, %v43
    %62 = vmatprep.subr.mxu0 0.0
    %v63 = vand.u32 %v45, 4294901760
    %64 = vmatpush1.msra.mxu0 %v63
    %65 = vmatprep.subr.mxu0 0.0
    %v66 = vand.u32 %v46, 4294901760
    %67 = vmatpush1.msra.mxu0 %v66
    %68 = vmatprep.subr.mxu0 0.0
    %v69 = vand.u32 %v47, 4294901760
    %70 = vmatpush1.msra.mxu0 %v69
    %71 = vmatprep.subr.mxu0 0.0
    %v72 = vand.u32 %v48, 4294901760
    %73 = vmatpush1.msra.mxu0 %v72
    %74 = vmatprep.subr.mxu0 0.0
    %v75 = vand.u32 %v49, 4294901760
    %76 = vmatpush1.msra.mxu0 %v75
    %77 = vmatprep.subr.mxu0 0.0
    %v78 = vand.u32 %v50, 4294901760
    %79 = vmatpush1.msra.mxu0 %v78
    %80 = vmatprep.subr.mxu0 0.0
    %v81 = vand.u32 %v51, 4294901760
    %82 = vmatpush1.msra.mxu0 %v81
    %83 = vmatprep.subr.mxu0 0.0
    %v84 = vand.u32 %v52, 4294901760
    %85 = vmatpush1.msra.mxu0 %v84
    %86 = vmatprep.subr.mxu0 0.0
    %v87 = vand.u32 %v53, 4294901760
    %88 = vmatpush1.msra.mxu0 %v87
    %89 = vmatprep.subr.mxu0 0.0
    %v90 = vand.u32 %v54, 4294901760
    %91 = vmatpush1.msra.mxu0 %v90
    %92 = vmatprep.subr.mxu0 0.0
    %v93 = vand.u32 %v55, 4294901760
    %94 = vmatpush1.msra.mxu0 %v93
    %95 = vmatprep.subr.mxu0 0.0
    %v96 = vand.u32 %v56, 4294901760
    %97 = vmatpush1.msra.mxu0 %v96
    %98 = vmatprep.subr.mxu0 0.0
    %v99 = vand.u32 %v57, 4294901760
    %100 = vmatpush1.msra.mxu0 %v99
    %101 = vmatprep.subr.mxu0 0.0
    %v102 = vand.u32 %v58, 4294901760
    %103 = vmatpush1.msra.mxu0 %v102
    %104 = vmatprep.subr.mxu0 0.0
    %v105 = vand.u32 %v59, 4294901760
    %106 = vmatpush1.msra.mxu0 %v105
    %107 = vmatprep.subr.mxu0 0.0
    %v108 = vand.u32 %v60, 4294901760
    %109 = vmatpush1.msra.mxu0 %v108
    %110 = vmatprep.subr.mxu0 0.0
    %111 = vmatpush1.msra.mxu0 0.0
    %112 = vmatprep.subr.mxu0 0.0
    %113 = vmatpush1.msra.mxu0 0.0
    %114 = vmatprep.subr.mxu0 0.0
    %115 = vmatpush1.msra.mxu0 0.0
    %116 = vmatprep.subr.mxu0 0.0
    %117 = vmatpush1.msra.mxu0 0.0
    %118 = vmatprep.subr.mxu0 0.0
    %119 = vmatpush1.msra.mxu0 0.0
    %120 = vmatprep.subr.mxu0 0.0
    %121 = vmatpush1.msra.mxu0 0.0
    %122 = vmatprep.subr.mxu0 0.0
    %123 = vmatpush1.msra.mxu0 0.0
    %124 = vmatprep.subr.mxu0 0.0
    %125 = vmatpush1.msra.mxu0 0.0
    %126 = vmatprep.subr.mxu0 0.0
    %127 = vmatpush1.msra.mxu0 0.0
    %128 = vmatprep.subr.mxu0 0.0
    %129 = vmatpush1.msra.mxu0 0.0
    %130 = vmatprep.subr.mxu0 0.0
    %131 = vmatpush1.msra.mxu0 0.0
    %132 = vmatprep.subr.mxu0 0.0
    %133 = vmatpush1.msra.mxu0 0.0
    %134 = vmatprep.subr.mxu0 0.0
    %135 = vmatpush1.msra.mxu0 0.0
    %136 = vmatprep.subr.mxu0 0.0
    %137 = vmatpush1.msra.mxu0 0.0
    %138 = vmatprep.subr.mxu0 0.0
    %139 = vmatpush1.msra.mxu0 0.0
    %140 = vmatprep.subr.mxu0 0.0
    %141 = vmatpush1.msra.mxu0 0.0
    %142 = vmatprep.mubr.f32.mxu0 0.0
    %v143 = vand.u32 %v61, 4294901760
    %v144 = vsub.f32 %v61, %v143
    %v145 = vand.u32 %v144, 4294901760
    %v146 = vsub.f32 %v144, %v145
    %v147 = vand.u32 %v146, 4294901760
    %148 = vmatmul.mubr.f32.gmra.mrb[0].mxu0 %v147
    %v149 = vpop.f32.mrb[0].mxu0
    %v150 = vadd.f32 0.0, %v149
    %v151 = vpop.f32.mrb[0].mxu0
    %152 = vdwg.mxu0
    %153 = vmatprep.subr.mxu0 0.0
    %v154 = vand.u32 %v45, 4294901760
    %v155 = vsub.f32 %v45, %v154
    %v156 = vand.u32 %v155, 4294901760
    %v157 = vsub.f32 %v155, %v156
    %v158 = vand.u32 %v157, 4294901760
    %159 = vmatpush1.msra.mxu0 %v158
    %160 = vmatprep.subr.mxu0 0.0
    %v161 = vand.u32 %v46, 4294901760
    %v162 = vsub.f32 %v46, %v161
    %v163 = vand.u32 %v162, 4294901760
    %v164 = vsub.f32 %v162, %v163
    %v165 = vand.u32 %v164, 4294901760
    %166 = vmatpush1.msra.mxu0 %v165
    %167 = vmatprep.subr.mxu0 0.0
    %v168 = vand.u32 %v47, 4294901760
    %v169 = vsub.f32 %v47, %v168
    %v170 = vand.u32 %v169, 4294901760
    %v171 = vsub.f32 %v169, %v170
    %v172 = vand.u32 %v171, 4294901760
    %173 = vmatpush1.msra.mxu0 %v172
    %174 = vmatprep.subr.mxu0 0.0
    %v175 = vand.u32 %v48, 4294901760
    %v176 = vsub.f32 %v48, %v175
    %v177 = vand.u32 %v176, 4294901760
    %v178 = vsub.f32 %v176, %v177
    %v179 = vand.u32 %v178, 4294901760
    %180 = vmatpush1.msra.mxu0 %v179
    %181 = vmatprep.subr.mxu0 0.0
    %v182 = vand.u32 %v49, 4294901760
    %v183 = vsub.f32 %v49, %v182
    %v184 = vand.u32 %v183, 4294901760
    %v185 = vsub.f32 %v183, %v184
    %v186 = vand.u32 %v185, 4294901760
    %187 = vmatpush1.msra.mxu0 %v186
    %188 = vmatprep.subr.mxu0 0.0
    %v189 = vand.u32 %v50, 4294901760
    %v190 = vsub.f32 %v50, %v189
    %v191 = vand.u32 %v190, 4294901760
    %v192 = vsub.f32 %v190, %v191
    %v193 = vand.u32 %v192, 4294901760
    %194 = vmatpush1.msra.mxu0 %v193
    %195 = vmatprep.subr.mxu0 0.0
    %v196 = vand.u32 %v51, 4294901760
    %v197 = vsub.f32 %v51, %v196
    %v198 = vand.u32 %v197, 4294901760
    %v199 = vsub.f32 %v197, %v198
    %v200 = vand.u32 %v199, 4294901760
    %201 = vmatpush1.msra.mxu0 %v200
    %202 = vmatprep.subr.mxu0 0.0
    %v203 = vand.u32 %v52, 4294901760
    %v204 = vsub.f32 %v52, %v203
    %v205 = vand.u32 %v204, 4294901760
    %v206 = vsub.f32 %v204, %v205
    %v207 = vand.u32 %v206, 4294901760
    %208 = vmatpush1.msra.mxu0 %v207
    %209 = vmatprep.subr.mxu0 0.0
    %v210 = vand.u32 %v53, 4294901760
    %v211 = vsub.f32 %v53, %v210
    %v212 = vand.u32 %v211, 4294901760
    %v213 = vsub.f32 %v211, %v212
    %v214 = vand.u32 %v213, 4294901760
    %215 = vmatpush1.msra.mxu0 %v214
    %216 = vmatprep.subr.mxu0 0.0
    %v217 = vand.u32 %v54, 4294901760
    %v218 = vsub.f32 %v54, %v217
    %v219 = vand.u32 %v218, 4294901760
    %v220 = vsub.f32 %v218, %v219
    %v221 = vand.u32 %v220, 4294901760
    %222 = vmatpush1.msra.mxu0 %v221
    %223 = vmatprep.subr.mxu0 0.0
    %v224 = vand.u32 %v55, 4294901760
    %v225 = vsub.f32 %v55, %v224
    %v226 = vand.u32 %v225, 4294901760
    %v227 = vsub.f32 %v225, %v226
    %v228 = vand.u32 %v227, 4294901760
    %229 = vmatpush1.msra.mxu0 %v228
    %230 = vmatprep.subr.mxu0 0.0
    %v231 = vand.u32 %v56, 4294901760
    %v232 = vsub.f32 %v56, %v231
    %v233 = vand.u32 %v232, 4294901760
    %v234 = vsub.f32 %v232, %v233
    %v235 = vand.u32 %v234, 4294901760
    %236 = vmatpush1.msra.mxu0 %v235
    %237 = vmatprep.subr.mxu0 0.0
    %v238 = vand.u32 %v57, 4294901760
    %v239 = vsub.f32 %v57, %v238
    %v240 = vand.u32 %v239, 4294901760
    %v241 = vsub.f32 %v239, %v240
    %v242 = vand.u32 %v241, 4294901760
    %243 = vmatpush1.msra.mxu0 %v242
    %244 = vmatprep.subr.mxu0 0.0
    %v245 = vand.u32 %v58, 4294901760
    %v246 = vsub.f32 %v58, %v245
    %v247 = vand.u32 %v246, 4294901760
    %v248 = vsub.f32 %v246, %v247
    %v249 = vand.u32 %v248, 4294901760
    %250 = vmatpush1.msra.mxu0 %v249
    %251 = vmatprep.subr.mxu0 0.0
    %v252 = vand.u32 %v59, 4294901760
    %v253 = vsub.f32 %v59, %v252
    %v254 = vand.u32 %v253, 4294901760
    %v255 = vsub.f32 %v253, %v254
    %v256 = vand.u32 %v255, 4294901760
    %257 = vmatpush1.msra.mxu0 %v256
    %258 = vmatprep.subr.mxu0 0.0
    %v259 = vand.u32 %v60, 4294901760
    %v260 = vsub.f32 %v60, %v259
    %v261 = vand.u32 %v260, 4294901760
    %v262 = vsub.f32 %v260, %v261
    %v263 = vand.u32 %v262, 4294901760
    %264 = vmatpush1.msra.mxu0 %v263
    %265 = vmatprep.subr.mxu0 0.0
    %266 = vmatpush1.msra.mxu0 0.0
    %267 = vmatprep.subr.mxu0 0.0
    %268 = vmatpush1.msra.mxu0 0.0
    %269 = vmatprep.subr.mxu0 0.0
    %270 = vmatpush1.msra.mxu0 0.0
    %271 = vmatprep.subr.mxu0 0.0
    %272 = vmatpush1.msra.mxu0 0.0
    %273 = vmatprep.subr.mxu0 0.0
    %274 = vmatpush1.msra.mxu0 0.0
    %275 = vmatprep.subr.mxu0 0.0
    %276 = vmatpush1.msra.mxu0 0.0
    %277 = vmatprep.subr.mxu0 0.0
    %278 = vmatpush1.msra.mxu0 0.0
    %279 = vmatprep.subr.mxu0 0.0
    %280 = vmatpush1.msra.mxu0 0.0
    %281 = vmatprep.subr.mxu0 0.0
    %282 = vmatpush1.msra.mxu0 0.0
    %283 = vmatprep.subr.mxu0 0.0
    %284 = vmatpush1.msra.mxu0 0.0
    %285 = vmatprep.subr.mxu0 0.0
    %286 = vmatpush1.msra.mxu0 0.0
    %287 = vmatprep.subr.mxu0 0.0
    %288 = vmatpush1.msra.mxu0 0.0
    %289 = vmatprep.subr.mxu0 0.0
    %290 = vmatpush1.msra.mxu0 0.0
    %291 = vmatprep.subr.mxu0 0.0
    %292 = vmatpush1.msra.mxu0 0.0
    %293 = vmatprep.subr.mxu0 0.0
    %294 = vmatpush1.msra.mxu0 0.0
    %295 = vmatprep.subr.mxu0 0.0
    %296 = vmatpush1.msra.mxu0 0.0
    %297 = vmatprep.mubr.f32.mxu0 0.0
    %v298 = vand.u32 %v61, 4294901760
    %299 = vmatmul.mubr.f32.gmra.mrb[0].mxu0 %v298
    %v300 = vpop.f32.mrb[0].mxu0
    %v301 = vadd.f32 %v150, %v300
    %v302 = vpop.f32.mrb[0].mxu0
    %303 = vdwg.mxu0
    %304 = vmatprep.subr.mxu0 0.0
    %v305 = vand.u32 %v45, 4294901760
    %v306 = vsub.f32 %v45, %v305
    %307 = vmatpush1.msra.mxu0 %v306
    %308 = vmatprep.subr.mxu0 0.0
    %v309 = vand.u32 %v46, 4294901760
    %v310 = vsub.f32 %v46, %v309
    %311 = vmatpush1.msra.mxu0 %v310
    %312 = vmatprep.subr.mxu0 0.0
    %v313 = vand.u32 %v47, 4294901760
    %v314 = vsub.f32 %v47, %v313
    %315 = vmatpush1.msra.mxu0 %v314
    %316 = vmatprep.subr.mxu0 0.0
    %v317 = vand.u32 %v48, 4294901760
    %v318 = vsub.f32 %v48, %v317
    %319 = vmatpush1.msra.mxu0 %v318
    %320 = vmatprep.subr.mxu0 0.0
    %v321 = vand.u32 %v49, 4294901760
    %v322 = vsub.f32 %v49, %v321
    %323 = vmatpush1.msra.mxu0 %v322
    %324 = vmatprep.subr.mxu0 0.0
    %v325 = vand.u32 %v50, 4294901760
    %v326 = vsub.f32 %v50, %v325
    %327 = vmatpush1.msra.mxu0 %v326
    %328 = vmatprep.subr.mxu0 0.0
    %v329 = vand.u32 %v51, 4294901760
    %v330 = vsub.f32 %v51, %v329
    %331 = vmatpush1.msra.mxu0 %v330
    %332 = vmatprep.subr.mxu0 0.0
    %v333 = vand.u32 %v52, 4294901760
    %v334 = vsub.f32 %v52, %v333
    %335 = vmatpush1.msra.mxu0 %v334
    %336 = vmatprep.subr.mxu0 0.0
    %v337 = vand.u32 %v53, 4294901760
    %v338 = vsub.f32 %v53, %v337
    %339 = vmatpush1.msra.mxu0 %v338
    %340 = vmatprep.subr.mxu0 0.0
    %v341 = vand.u32 %v54, 4294901760
    %v342 = vsub.f32 %v54, %v341
    %343 = vmatpush1.msra.mxu0 %v342
    %344 = vmatprep.subr.mxu0 0.0
    %v345 = vand.u32 %v55, 4294901760
    %v346 = vsub.f32 %v55, %v345
    %347 = vmatpush1.msra.mxu0 %v346
    %348 = vmatprep.subr.mxu0 0.0
    %v349 = vand.u32 %v56, 4294901760
    %v350 = vsub.f32 %v56, %v349
    %351 = vmatpush1.msra.mxu0 %v350
    %352 = vmatprep.subr.mxu0 0.0
    %v353 = vand.u32 %v57, 4294901760
    %v354 = vsub.f32 %v57, %v353
    %355 = vmatpush1.msra.mxu0 %v354
    %356 = vmatprep.subr.mxu0 0.0
    %v357 = vand.u32 %v58, 4294901760
    %v358 = vsub.f32 %v58, %v357
    %359 = vmatpush1.msra.mxu0 %v358
    %360 = vmatprep.subr.mxu0 0.0
    %v361 = vand.u32 %v59, 4294901760
    %v362 = vsub.f32 %v59, %v361
    %363 = vmatpush1.msra.mxu0 %v362
    %364 = vmatprep.subr.mxu0 0.0
    %v365 = vand.u32 %v60, 4294901760
    %v366 = vsub.f32 %v60, %v365
    %367 = vmatpush1.msra.mxu0 %v366
    %368 = vmatprep.subr.mxu0 0.0
    %369 = vmatpush1.msra.mxu0 0.0
    %370 = vmatprep.subr.mxu0 0.0
    %371 = vmatpush1.msra.mxu0 0.0
    %372 = vmatprep.subr.mxu0 0.0
    %373 = vmatpush1.msra.mxu0 0.0
    %374 = vmatprep.subr.mxu0 0.0
    %375 = vmatpush1.msra.mxu0 0.0
    %376 = vmatprep.subr.mxu0 0.0
    %377 = vmatpush1.msra.mxu0 0.0
    %378 = vmatprep.subr.mxu0 0.0
    %379 = vmatpush1.msra.mxu0 0.0
    %380 = vmatprep.subr.mxu0 0.0
    %381 = vmatpush1.msra.mxu0 0.0
    %382 = vmatprep.subr.mxu0 0.0
    %383 = vmatpush1.msra.mxu0 0.0
    %384 = vmatprep.subr.mxu0 0.0
    %385 = vmatpush1.msra.mxu0 0.0
    %386 = vmatprep.subr.mxu0 0.0
    %387 = vmatpush1.msra.mxu0 0.0
    %388 = vmatprep.subr.mxu0 0.0
    %389 = vmatpush1.msra.mxu0 0.0
    %390 = vmatprep.subr.mxu0 0.0
    %391 = vmatpush1.msra.mxu0 0.0
    %392 = vmatprep.subr.mxu0 0.0
    %393 = vmatpush1.msra.mxu0 0.0
    %394 = vmatprep.subr.mxu0 0.0
    %395 = vmatpush1.msra.mxu0 0.0
    %396 = vmatprep.subr.mxu0 0.0
    %397 = vmatpush1.msra.mxu0 0.0
    %398 = vmatprep.subr.mxu0 0.0
    %399 = vmatpush1.msra.mxu0 0.0
    %400 = vmatprep.mubr.f32.mxu0 0.0
    %v401 = vand.u32 %v61, 4294901760
    %v402 = vsub.f32 %v61, %v401
    %403 = vmatmul.mubr.f32.gmra.mrb[0].mxu0 %v402
    %v404 = vpop.f32.mrb[0].mxu0
    %v405 = vadd.f32 %v301, %v404
    %v406 = vpop.f32.mrb[0].mxu0
    %407 = vdwg.mxu0
    %408 = vmatprep.subr.mxu0 0.0
    %v409 = vand.u32 %v45, 4294901760
    %410 = vmatpush1.msra.mxu0 %v409
    %411 = vmatprep.subr.mxu0 0.0
    %v412 = vand.u32 %v46, 4294901760
    %413 = vmatpush1.msra.mxu0 %v412
    %414 = vmatprep.subr.mxu0 0.0
    %v415 = vand.u32 %v47, 4294901760
    %416 = vmatpush1.msra.mxu0 %v415
    %417 = vmatprep.subr.mxu0 0.0
    %v418 = vand.u32 %v48, 4294901760
    %419 = vmatpush1.msra.mxu0 %v418
    %420 = vmatprep.subr.mxu0 0.0
    %v421 = vand.u32 %v49, 4294901760
    %422 = vmatpush1.msra.mxu0 %v421
    %423 = vmatprep.subr.mxu0 0.0
    %v424 = vand.u32 %v50, 4294901760
    %425 = vmatpush1.msra.mxu0 %v424
    %426 = vmatprep.subr.mxu0 0.0
    %v427 = vand.u32 %v51, 4294901760
    %428 = vmatpush1.msra.mxu0 %v427
    %429 = vmatprep.subr.mxu0 0.0
    %v430 = vand.u32 %v52, 4294901760
    %431 = vmatpush1.msra.mxu0 %v430
    %432 = vmatprep.subr.mxu0 0.0
    %v433 = vand.u32 %v53, 4294901760
    %434 = vmatpush1.msra.mxu0 %v433
    %435 = vmatprep.subr.mxu0 0.0
    %v436 = vand.u32 %v54, 4294901760
    %437 = vmatpush1.msra.mxu0 %v436
    %438 = vmatprep.subr.mxu0 0.0
    %v439 = vand.u32 %v55, 4294901760
    %440 = vmatpush1.msra.mxu0 %v439
    %441 = vmatprep.subr.mxu0 0.0
    %v442 = vand.u32 %v56, 4294901760
    %443 = vmatpush1.msra.mxu0 %v442
    %444 = vmatprep.subr.mxu0 0.0
    %v445 = vand.u32 %v57, 4294901760
    %446 = vmatpush1.msra.mxu0 %v445
    %447 = vmatprep.subr.mxu0 0.0
    %v448 = vand.u32 %v58, 4294901760
    %449 = vmatpush1.msra.mxu0 %v448
    %450 = vmatprep.subr.mxu0 0.0
    %v451 = vand.u32 %v59, 4294901760
    %452 = vmatpush1.msra.mxu0 %v451
    %453 = vmatprep.subr.mxu0 0.0
    %v454 = vand.u32 %v60, 4294901760
    %455 = vmatpush1.msra.mxu0 %v454
    %456 = vmatprep.subr.mxu0 0.0
    %457 = vmatpush1.msra.mxu0 0.0
    %458 = vmatprep.subr.mxu0 0.0
    %459 = vmatpush1.msra.mxu0 0.0
    %460 = vmatprep.subr.mxu0 0.0
    %461 = vmatpush1.msra.mxu0 0.0
    %462 = vmatprep.subr.mxu0 0.0
    %463 = vmatpush1.msra.mxu0 0.0
    %464 = vmatprep.subr.mxu0 0.0
    %465 = vmatpush1.msra.mxu0 0.0
    %466 = vmatprep.subr.mxu0 0.0
    %467 = vmatpush1.msra.mxu0 0.0
    %468 = vmatprep.subr.mxu0 0.0
    %469 = vmatpush1.msra.mxu0 0.0
    %470 = vmatprep.subr.mxu0 0.0
    %471 = vmatpush1.msra.mxu0 0.0
    %472 = vmatprep.subr.mxu0 0.0
    %473 = vmatpush1.msra.mxu0 0.0
    %474 = vmatprep.subr.mxu0 0.0
    %475 = vmatpush1.msra.mxu0 0.0
    %476 = vmatprep.subr.mxu0 0.0
    %477 = vmatpush1.msra.mxu0 0.0
    %478 = vmatprep.subr.mxu0 0.0
    %479 = vmatpush1.msra.mxu0 0.0
    %480 = vmatprep.subr.mxu0 0.0
    %481 = vmatpush1.msra.mxu0 0.0
    %482 = vmatprep.subr.mxu0 0.0
    %483 = vmatpush1.msra.mxu0 0.0
    %484 = vmatprep.subr.mxu0 0.0
    %485 = vmatpush1.msra.mxu0 0.0
    %486 = vmatprep.subr.mxu0 0.0
    %487 = vmatpush1.msra.mxu0 0.0
    %488 = vmatprep.mubr.f32.mxu0 0.0
    %v489 = vand.u32 %v61, 4294901760
    %v490 = vsub.f32 %v61, %v489
    %v491 = vand.u32 %v490, 4294901760
    %492 = vmatmul.mubr.f32.gmra.mrb[0].mxu0 %v491
    %v493 = vpop.f32.mrb[0].mxu0
    %v494 = vadd.f32 %v405, %v493
    %v495 = vpop.f32.mrb[0].mxu0
    %496 = vdwg.mxu0
    %497 = vmatprep.subr.mxu0 0.0
    %v498 = vand.u32 %v45, 4294901760
    %v499 = vsub.f32 %v45, %v498
    %v500 = vand.u32 %v499, 4294901760
    %501 = vmatpush1.msra.mxu0 %v500
    %502 = vmatprep.subr.mxu0 0.0
    %v503 = vand.u32 %v46, 4294901760
    %v504 = vsub.f32 %v46, %v503
    %v505 = vand.u32 %v504, 4294901760
    %506 = vmatpush1.msra.mxu0 %v505
    %507 = vmatprep.subr.mxu0 0.0
    %v508 = vand.u32 %v47, 4294901760
    %v509 = vsub.f32 %v47, %v508
    %v510 = vand.u32 %v509, 4294901760
    %511 = vmatpush1.msra.mxu0 %v510
    %512 = vmatprep.subr.mxu0 0.0
    %v513 = vand.u32 %v48, 4294901760
    %v514 = vsub.f32 %v48, %v513
    %v515 = vand.u32 %v514, 4294901760
    %516 = vmatpush1.msra.mxu0 %v515
    %517 = vmatprep.subr.mxu0 0.0
    %v518 = vand.u32 %v49, 4294901760
    %v519 = vsub.f32 %v49, %v518
    %v520 = vand.u32 %v519, 4294901760
    %521 = vmatpush1.msra.mxu0 %v520
    %522 = vmatprep.subr.mxu0 0.0
    %v523 = vand.u32 %v50, 4294901760
    %v524 = vsub.f32 %v50, %v523
    %v525 = vand.u32 %v524, 4294901760
    %526 = vmatpush1.msra.mxu0 %v525
    %527 = vmatprep.subr.mxu0 0.0
    %v528 = vand.u32 %v51, 4294901760
    %v529 = vsub.f32 %v51, %v528
    %v530 = vand.u32 %v529, 4294901760
    %531 = vmatpush1.msra.mxu0 %v530
    %532 = vmatprep.subr.mxu0 0.0
    %v533 = vand.u32 %v52, 4294901760
    %v534 = vsub.f32 %v52, %v533
    %v535 = vand.u32 %v534, 4294901760
    %536 = vmatpush1.msra.mxu0 %v535
    %537 = vmatprep.subr.mxu0 0.0
    %v538 = vand.u32 %v53, 4294901760
    %v539 = vsub.f32 %v53, %v538
    %v540 = vand.u32 %v539, 4294901760
    %541 = vmatpush1.msra.mxu0 %v540
    %542 = vmatprep.subr.mxu0 0.0
    %v543 = vand.u32 %v54, 4294901760
    %v544 = vsub.f32 %v54, %v543
    %v545 = vand.u32 %v544, 4294901760
    %546 = vmatpush1.msra.mxu0 %v545
    %547 = vmatprep.subr.mxu0 0.0
    %v548 = vand.u32 %v55, 4294901760
    %v549 = vsub.f32 %v55, %v548
    %v550 = vand.u32 %v549, 4294901760
    %551 = vmatpush1.msra.mxu0 %v550
    %552 = vmatprep.subr.mxu0 0.0
    %v553 = vand.u32 %v56, 4294901760
    %v554 = vsub.f32 %v56, %v553
    %v555 = vand.u32 %v554, 4294901760
    %556 = vmatpush1.msra.mxu0 %v555
    %557 = vmatprep.subr.mxu0 0.0
    %v558 = vand.u32 %v57, 4294901760
    %v559 = vsub.f32 %v57, %v558
    %v560 = vand.u32 %v559, 4294901760
    %561 = vmatpush1.msra.mxu0 %v560
    %562 = vmatprep.subr.mxu0 0.0
    %v563 = vand.u32 %v58, 4294901760
    %v564 = vsub.f32 %v58, %v563
    %v565 = vand.u32 %v564, 4294901760
    %566 = vmatpush1.msra.mxu0 %v565
    %567 = vmatprep.subr.mxu0 0.0
    %v568 = vand.u32 %v59, 4294901760
    %v569 = vsub.f32 %v59, %v568
    %v570 = vand.u32 %v569, 4294901760
    %571 = vmatpush1.msra.mxu0 %v570
    %572 = vmatprep.subr.mxu0 0.0
    %v573 = vand.u32 %v60, 4294901760
    %v574 = vsub.f32 %v60, %v573
    %v575 = vand.u32 %v574, 4294901760
    %576 = vmatpush1.msra.mxu0 %v575
    %577 = vmatprep.subr.mxu0 0.0
    %578 = vmatpush1.msra.mxu0 0.0
    %579 = vmatprep.subr.mxu0 0.0
    %580 = vmatpush1.msra.mxu0 0.0
    %581 = vmatprep.subr.mxu0 0.0
    %582 = vmatpush1.msra.mxu0 0.0
    %583 = vmatprep.subr.mxu0 0.0
    %584 = vmatpush1.msra.mxu0 0.0
    %585 = vmatprep.subr.mxu0 0.0
    %586 = vmatpush1.msra.mxu0 0.0
    %587 = vmatprep.subr.mxu0 0.0
    %588 = vmatpush1.msra.mxu0 0.0
    %589 = vmatprep.subr.mxu0 0.0
    %590 = vmatpush1.msra.mxu0 0.0
    %591 = vmatprep.subr.mxu0 0.0
    %592 = vmatpush1.msra.mxu0 0.0
    %593 = vmatprep.subr.mxu0 0.0
    %594 = vmatpush1.msra.mxu0 0.0
    %595 = vmatprep.subr.mxu0 0.0
    %596 = vmatpush1.msra.mxu0 0.0
    %597 = vmatprep.subr.mxu0 0.0
    %598 = vmatpush1.msra.mxu0 0.0
    %599 = vmatprep.subr.mxu0 0.0
    %600 = vmatpush1.msra.mxu0 0.0
    %601 = vmatprep.subr.mxu0 0.0
    %602 = vmatpush1.msra.mxu0 0.0
    %603 = vmatprep.subr.mxu0 0.0
    %604 = vmatpush1.msra.mxu0 0.0
    %605 = vmatprep.subr.mxu0 0.0
    %606 = vmatpush1.msra.mxu0 0.0
    %607 = vmatprep.subr.mxu0 0.0
    %608 = vmatpush1.msra.mxu0 0.0
    %609 = vmatprep.mubr.f32.mxu0 0.0
    %v610 = vand.u32 %v61, 4294901760
    %611 = vmatmul.mubr.f32.gmra.mrb[0].mxu0 %v610
    %v612 = vpop.f32.mrb[0].mxu0
    %v613 = vadd.f32 %v494, %v612
    %v614 = vpop.f32.mrb[0].mxu0
    %615 = vdwg.mxu0
    %616 = vmatprep.subr.mxu0 0.0
    %v617 = vand.u32 %v45, 4294901760
    %618 = vmatpush1.msra.mxu0 %v617
    %619 = vmatprep.subr.mxu0 0.0
    %v620 = vand.u32 %v46, 4294901760
    %621 = vmatpush1.msra.mxu0 %v620
    %622 = vmatprep.subr.mxu0 0.0
    %v623 = vand.u32 %v47, 4294901760
    %624 = vmatpush1.msra.mxu0 %v623
    %625 = vmatprep.subr.mxu0 0.0
    %v626 = vand.u32 %v48, 4294901760
    %627 = vmatpush1.msra.mxu0 %v626
    %628 = vmatprep.subr.mxu0 0.0
    %v629 = vand.u32 %v49, 4294901760
    %630 = vmatpush1.msra.mxu0 %v629
    %631 = vmatprep.subr.mxu0 0.0
    %v632 = vand.u32 %v50, 4294901760
    %633 = vmatpush1.msra.mxu0 %v632
    %634 = vmatprep.subr.mxu0 0.0
    %v635 = vand.u32 %v51, 4294901760
    %636 = vmatpush1.msra.mxu0 %v635
    %637 = vmatprep.subr.mxu0 0.0
    %v638 = vand.u32 %v52, 4294901760
    %639 = vmatpush1.msra.mxu0 %v638
    %640 = vmatprep.subr.mxu0 0.0
    %v641 = vand.u32 %v53, 4294901760
    %642 = vmatpush1.msra.mxu0 %v641
    %643 = vmatprep.subr.mxu0 0.0
    %v644 = vand.u32 %v54, 4294901760
    %645 = vmatpush1.msra.mxu0 %v644
    %646 = vmatprep.subr.mxu0 0.0
    %v647 = vand.u32 %v55, 4294901760
    %648 = vmatpush1.msra.mxu0 %v647
    %649 = vmatprep.subr.mxu0 0.0
    %v650 = vand.u32 %v56, 4294901760
    %651 = vmatpush1.msra.mxu0 %v650
    %652 = vmatprep.subr.mxu0 0.0
    %v653 = vand.u32 %v57, 4294901760
    %654 = vmatpush1.msra.mxu0 %v653
    %655 = vmatprep.subr.mxu0 0.0
    %v656 = vand.u32 %v58, 4294901760
    %657 = vmatpush1.msra.mxu0 %v656
    %658 = vmatprep.subr.mxu0 0.0
    %v659 = vand.u32 %v59, 4294901760
    %660 = vmatpush1.msra.mxu0 %v659
    %661 = vmatprep.subr.mxu0 0.0
    %v662 = vand.u32 %v60, 4294901760
    %663 = vmatpush1.msra.mxu0 %v662
    %664 = vmatprep.subr.mxu0 0.0
    %665 = vmatpush1.msra.mxu0 0.0
    %666 = vmatprep.subr.mxu0 0.0
    %667 = vmatpush1.msra.mxu0 0.0
    %668 = vmatprep.subr.mxu0 0.0
    %669 = vmatpush1.msra.mxu0 0.0
    %670 = vmatprep.subr.mxu0 0.0
    %671 = vmatpush1.msra.mxu0 0.0
    %672 = vmatprep.subr.mxu0 0.0
    %673 = vmatpush1.msra.mxu0 0.0
    %674 = vmatprep.subr.mxu0 0.0
    %675 = vmatpush1.msra.mxu0 0.0
    %676 = vmatprep.subr.mxu0 0.0
    %677 = vmatpush1.msra.mxu0 0.0
    %678 = vmatprep.subr.mxu0 0.0
    %679 = vmatpush1.msra.mxu0 0.0
    %680 = vmatprep.subr.mxu0 0.0
    %681 = vmatpush1.msra.mxu0 0.0
    %682 = vmatprep.subr.mxu0 0.0
    %683 = vmatpush1.msra.mxu0 0.0
    %684 = vmatprep.subr.mxu0 0.0
    %685 = vmatpush1.msra.mxu0 0.0
    %686 = vmatprep.subr.mxu0 0.0
    %687 = vmatpush1.msra.mxu0 0.0
    %688 = vmatprep.subr.mxu0 0.0
    %689 = vmatpush1.msra.mxu0 0.0
    %690 = vmatprep.subr.mxu0 0.0
    %691 = vmatpush1.msra.mxu0 0.0
    %692 = vmatprep.subr.mxu0 0.0
    %693 = vmatpush1.msra.mxu0 0.0
    %694 = vmatprep.subr.mxu0 0.0
    %695 = vmatpush1.msra.mxu0 0.0
    %696 = vmatprep.mubr.f32.mxu0 0.0
    %v697 = vand.u32 %v61, 4294901760
    %698 = vmatmul.mubr.f32.gmra.mrb[0].mxu0 %v697
    %v699 = vpop.f32.mrb[0].mxu0
    %v700 = vadd.f32 %v613, %v699
    %v701 = vpop.f32.mrb[0].mxu0
    %702 = vdwg.mxu0
    %v703 = vmul.f32 %v700, 0.03125
    %v704 = vadd.f32 %v703, 1e-06
    %v705 = vrsqrt.pop %v704
    %v706 = vmul.f32 %v43, %v705
    %v708 = vlaneseq
    %v709 = vshrl.u32 %v708, 7
    %v710 = vsub.s32 0, %v709
    %v711 = vrot.slane %v44, %v710
    %v713 = vmul.f32 %v706, %v711
    %714 = vst [vmem:[#allocation7] sm:$0xff] %v713
    // Predicated region
    $region22: #{tpu_custom_call.1} parent=1 // pred_check
      _
    $region23: #{tpu_custom_call.1} parent=1 // pred_check_branch
      %716 = sbr.rel (0) target = $region25
    $region24: #{tpu_custom_call.1} parent=1 // pred_region
      %s718 = ssub.s32 128, 64
      %719 = vsyncadd [#allocation4], %s718
      %s720 = sshll.u32 [#allocation7], 4
      %s721 = int_to_ptr.vmem [resolvable:$true] %s720
      %726 = dma.vmem_to_hbm [thread:$0]  %s721, 64, %s3, [#allocation4], 64, 64, 4
    $region25: #{tpu_custom_call.1} parent=1 // pred_fallthru
      _
    // Predicated region
    $region26: #{tpu_custom_call.1} parent=1 // pred_check
      _
    $region27: #{tpu_custom_call.1} parent=1 // pred_check_branch
      %728 = sbr.rel (0) target = $region29
    $region28: #{tpu_custom_call.1} parent=1 // pred_region
      %729 = dma.done [#allocation4], 128
    $region29: #{tpu_custom_call.1} parent=1 // pred_fallthru
      _
    %730 = vsyncpa [#allocation3], 1
    %731 = vsyncpa [#allocation6], 1
    %732 = vsyncpa [#allocation4], 1

</llo_original>
